<compile_context>
chip_gen: v7x
topology: tpu7x:2x2x1
jax: 0.10.0
libtpu: 0.0.40
codegen_flags: <defaults>
</compile_context>

<pallas_src>
import functools

import jax
import jax.numpy as jnp
from jax.experimental import pallas as pl
from jax.experimental.pallas import tpu as pltpu


def _gru_kernel(x_ref, wi_ref, wh_ref, b_ref, out_ref, *, seq, hid):
    """Whole GRU forward in one invocation.

    x_ref  : [B*S, W]   inputs, row = b*S + t (row-major view of x, no transpose)
    wi_ref : [W, GP]    packed, transposed input->hidden weights  [W_ir|W_iz|W_in|0]
    wh_ref : [H, GP]    packed, transposed hidden->hidden weights [W_hr|W_hz|W_hn|0]
    b_ref  : [2, GP]    row 0: [b_ir+b_hr | b_iz+b_hz | b_in | 0]
                        row 1: [0 | 0 | b_hn | 0]    (b_hn stays inside r * (...))
    out_ref: [B, H]     final hidden state
    """
    bs = x_ref.shape[0]
    batch = bs // seq
    gp = wi_ref.shape[-1]          # padded gate width (128)
    H = hid

    bi = b_ref[0:1, :]                                       # [1, GP]
    bh = jnp.broadcast_to(b_ref[1:2, :], (batch, gp))        # [B, GP] (hoisted broadcast)

    # ---- fused, hoisted input projection for ALL time steps (one matmul) ----
    gi = jnp.dot(x_ref[...], wi_ref[...],
                 preferred_element_type=jnp.float32) + bi    # [B*S, GP]
    # Layout-preserving view: S == 8 sublanes, GP == 128 lanes -> no re-tiling;
    # gi[:, t, :] below is a uniform sublane select.
    gi = gi.reshape(batch, seq, gp)

    w_h = wh_ref[...]                                        # [H, GP] (hoisted load)

    # ---- peeled t = 0 step: h0 == 0  =>  gh == (0|0|b_hn|0), no matmul ----
    gi0 = gi[:, 0, :]
    rz = jax.nn.sigmoid(gi0[:, 0:2 * H])                     # one 64-lane sigmoid
    r = rz[:, 0:H]
    z = rz[:, H:2 * H]
    n = jnp.tanh(gi0[:, 2 * H:3 * H] + r * bh[:, 2 * H:3 * H])
    h = n - z * n                                            # == (1 - z) * n + z * 0

    # ---- serial recurrence: one packed matmul + one sigmoid + one tanh per step ----
    for t in range(1, seq):
        gh = jnp.dot(h, w_h, preferred_element_type=jnp.float32) + bh   # [B, GP]
        gi_t = gi[:, t, :]
        rz = jax.nn.sigmoid(gi_t[:, 0:2 * H] + gh[:, 0:2 * H])
        r = rz[:, 0:H]
        z = rz[:, H:2 * H]
        n = jnp.tanh(gi_t[:, 2 * H:3 * H] + r * gh[:, 2 * H:3 * H])
        h = n + z * (h - n)                                  # == (1 - z) * n + z * h

    out_ref[...] = h.astype(out_ref.dtype)


def pack_gru_params(w_ih, w_hh, b_ih, b_hh, lane_pad=128):
    """One-time packing of PyTorch-layout GRU params (call at module init, not per forward).

    w_ih: [3H, W], w_hh: [3H, H], b_ih/b_hh: [3H]  (gate order r, z, n).
    Returns (wi_packed [W, GP], wh_packed [H, GP], b_packed [2, GP]) with GP a
    multiple of 128 (lane-padded).
    """
    f32 = jnp.float32
    w_ih = w_ih.astype(f32)
    w_hh = w_hh.astype(f32)
    b_ih = b_ih.astype(f32)
    b_hh = b_hh.astype(f32)

    H = w_hh.shape[1]
    gp = max(lane_pad, ((3 * H + lane_pad - 1) // lane_pad) * lane_pad)
    pad = gp - 3 * H

    wi_packed = jnp.pad(w_ih.T, ((0, 0), (0, pad)))          # [W, GP]
    wh_packed = jnp.pad(w_hh.T, ((0, 0), (0, pad)))          # [H, GP]

    b0 = jnp.concatenate([b_ih[:2 * H] + b_hh[:2 * H], b_ih[2 * H:]])   # r|z folded, b_in
    b1 = jnp.concatenate([jnp.zeros((2 * H,), f32), b_hh[2 * H:]])       # 0|0|b_hn
    b_packed = jnp.pad(jnp.stack([b0, b1]), ((0, 0), (0, pad)))           # [2, GP]
    return wi_packed, wh_packed, b_packed


@jax.jit
def question_embedding_forward(x, wi_packed, wh_packed, b_packed):
    """x: [batch, seq, w_dim] (PyTorch batch_first layout); packed params from
    pack_gru_params(). Returns [batch, H] == hidden.squeeze(0)."""
    B, S, W = x.shape
    H = wh_packed.shape[0]

    # Free row-major reshape — no transpose, no extra HBM round trip for x.
    x_flat = x.reshape(B * S, W).astype(jnp.float32)

    vmem_spec = pl.BlockSpec(memory_space=pltpu.MemorySpace.VMEM)

    return pl.pallas_call(
        functools.partial(_gru_kernel, seq=S, hid=H),
        out_shape=jax.ShapeDtypeStruct((B, H), jnp.float32),
        in_specs=[vmem_spec] * 4,
        out_specs=vmem_spec,
    )(x_flat, wi_packed, wh_packed, b_packed)


def _reference_gru(x, w_ih, w_hh, b_ih, b_hh):
    """Pure-JAX reference (mirrors torch.nn.GRU, 1 layer, unidirectional)."""
    B, S, W = x.shape
    H = w_hh.shape[1]
    wih_t = jnp.transpose(w_ih)
    whh_t = jnp.transpose(w_hh)

    def step(h, x_t):
        gi = x_t @ wih_t + b_ih
        gh = h @ whh_t + b_hh
        r = jax.nn.sigmoid(gi[:, :H] + gh[:, :H])
        z = jax.nn.sigmoid(gi[:, H:2 * H] + gh[:, H:2 * H])
        n = jnp.tanh(gi[:, 2 * H:] + r * gh[:, 2 * H:])
        h = (1.0 - z) * n + z * h
        return h, None

    h0 = jnp.zeros((B, H), jnp.float32)
    hT, _ = jax.lax.scan(step, h0, jnp.transpose(x, (1, 0, 2)))
    return hT


if __name__ == "__main__":
    # Module config: w_dim=32, hid_dim=32, nlayers=1, bidirect=False, GRU
    B, S, W, H = 2, 8, 32, 32

    key = jax.random.PRNGKey(0)
    kx, k1, k2, k3, k4 = jax.random.split(key, 5)

    bound = 1.0 / jnp.sqrt(H)  # PyTorch GRU default init: U(-1/sqrt(H), 1/sqrt(H))
    x = jax.random.normal(kx, (B, S, W), dtype=jnp.float32)
    w_ih = jax.random.uniform(k1, (3 * H, W), minval=-bound, maxval=bound, dtype=jnp.float32)
    w_hh = jax.random.uniform(k2, (3 * H, H), minval=-bound, maxval=bound, dtype=jnp.float32)
    b_ih = jax.random.uniform(k3, (3 * H,), minval=-bound, maxval=bound, dtype=jnp.float32)
    b_hh = jax.random.uniform(k4, (3 * H,), minval=-bound, maxval=bound, dtype=jnp.float32)

    # One-time packing (module-init analogue) — outside the per-call jitted path.
    wi_packed, wh_packed, b_packed = pack_gru_params(w_ih, w_hh, b_ih, b_hh)
    wi_packed, wh_packed, b_packed = jax.block_until_ready(
        (wi_packed, wh_packed, b_packed))

    out = question_embedding_forward(x, wi_packed, wh_packed, b_packed)
    out = jax.block_until_ready(out)

    ref = jax.block_until_ready(_reference_gru(x, w_ih, w_hh, b_ih, b_hh))
    assert out.shape == (B, H), out.shape
    assert jnp.allclose(out, ref, atol=1e-5, rtol=1e-5), (
        float(jnp.max(jnp.abs(out - ref)))
    )
    print("KERNEL_OK")
</pallas_src>

<mosaic_0001>
module attributes {stable_mosaic.version = 11 : i64} {
  func.func @_gru_kernel(%arg0: memref<16x32xf32, #tpu.memory_space<vmem>>, %arg1: memref<32x128xf32, #tpu.memory_space<vmem>>, %arg2: memref<32x128xf32, #tpu.memory_space<vmem>>, %arg3: memref<2x128xf32, #tpu.memory_space<vmem>>, %arg4: memref<2x32xf32, #tpu.memory_space<vmem>>) attributes {dimension_semantics = [], scalar_prefetch = 0 : i64, scratch_operands = 0 : i64, tpu.core_type = #tpu.core_type<tc>} {
    %c0 = arith.constant 0 : index
    %c0_0 = arith.constant 0 : index
    %0 = vector.load %arg3[%c0, %c0_0] : memref<2x128xf32, #tpu.memory_space<vmem>>, vector<1x128xf32>
    %c1 = arith.constant 1 : index
    %c0_1 = arith.constant 0 : index
    %1 = vector.load %arg3[%c1, %c0_1] : memref<2x128xf32, #tpu.memory_space<vmem>>, vector<1x128xf32>
    %2 = vector.shape_cast %1 : vector<1x128xf32> to vector<1x128xf32>
    %3 = vector.broadcast %2 : vector<1x128xf32> to vector<2x128xf32>
    %c0_2 = arith.constant 0 : index
    %c0_3 = arith.constant 0 : index
    %4 = vector.load %arg0[%c0_2, %c0_3] : memref<16x32xf32, #tpu.memory_space<vmem>>, vector<16x32xf32>
    %c0_4 = arith.constant 0 : index
    %c0_5 = arith.constant 0 : index
    %5 = vector.load %arg1[%c0_4, %c0_5] : memref<32x128xf32, #tpu.memory_space<vmem>>, vector<32x128xf32>
    %cst = arith.constant dense<0.000000e+00> : vector<16x128xf32>
    %6 = tpu.matmul %4, %5, %cst {dimension_numbers = #tpu.dot_dimension_numbers<[1], [0], [0], [1], [0, 0, 1, 1], [], []>} : vector<16x32xf32>, vector<32x128xf32>, vector<16x128xf32> -> vector<16x128xf32>
    %7 = vector.broadcast %0 : vector<1x128xf32> to vector<16x128xf32>
    %8 = arith.addf %6, %7 : vector<16x128xf32>
    %9 = vector.shape_cast %8 : vector<16x128xf32> to vector<2x8x128xf32>
    %c0_6 = arith.constant 0 : index
    %c0_7 = arith.constant 0 : index
    %10 = vector.load %arg2[%c0_6, %c0_7] : memref<32x128xf32, #tpu.memory_space<vmem>>, vector<32x128xf32>
    %11 = vector.extract_strided_slice %9 {offsets = [0, 0, 0], sizes = [2, 1, 128], strides = [1, 1, 1]} : vector<2x8x128xf32> to vector<2x1x128xf32>
    %12 = vector.shape_cast %11 : vector<2x1x128xf32> to vector<2x128xf32>
    %13 = vector.extract_strided_slice %12 {offsets = [0, 0], sizes = [2, 64], strides = [1, 1]} : vector<2x128xf32> to vector<2x64xf32>
    %14 = arith.negf %13 : vector<2x64xf32>
    %15 = math.exp %14 : vector<2x64xf32>
    %cst_8 = arith.constant 1.000000e+00 : f32
    %16 = vector.broadcast %cst_8 : f32 to vector<2x64xf32>
    %17 = arith.addf %16, %15 : vector<2x64xf32>
    %18 = arith.divf %16, %17 : vector<2x64xf32>
    %19 = vector.extract_strided_slice %18 {offsets = [0, 0], sizes = [2, 32], strides = [1, 1]} : vector<2x64xf32> to vector<2x32xf32>
    %20 = vector.extract_strided_slice %18 {offsets = [0, 32], sizes = [2, 32], strides = [1, 1]} : vector<2x64xf32> to vector<2x32xf32>
    %21 = vector.extract_strided_slice %12 {offsets = [0, 64], sizes = [2, 32], strides = [1, 1]} : vector<2x128xf32> to vector<2x32xf32>
    %22 = vector.extract_strided_slice %3 {offsets = [0, 64], sizes = [2, 32], strides = [1, 1]} : vector<2x128xf32> to vector<2x32xf32>
    %23 = arith.mulf %19, %22 : vector<2x32xf32>
    %24 = arith.addf %21, %23 : vector<2x32xf32>
    %25 = math.tanh %24 : vector<2x32xf32>
    %26 = arith.mulf %20, %25 : vector<2x32xf32>
    %27 = arith.subf %25, %26 : vector<2x32xf32>
    %cst_9 = arith.constant dense<0.000000e+00> : vector<2x128xf32>
    %28 = tpu.matmul %27, %10, %cst_9 {dimension_numbers = #tpu.dot_dimension_numbers<[1], [0], [0], [1], [0, 0, 1, 1], [], []>} : vector<2x32xf32>, vector<32x128xf32>, vector<2x128xf32> -> vector<2x128xf32>
    %29 = arith.addf %28, %3 : vector<2x128xf32>
    %30 = vector.extract_strided_slice %9 {offsets = [0, 1, 0], sizes = [2, 1, 128], strides = [1, 1, 1]} : vector<2x8x128xf32> to vector<2x1x128xf32>
    %31 = vector.shape_cast %30 : vector<2x1x128xf32> to vector<2x128xf32>
    %32 = vector.extract_strided_slice %31 {offsets = [0, 0], sizes = [2, 64], strides = [1, 1]} : vector<2x128xf32> to vector<2x64xf32>
    %33 = vector.extract_strided_slice %29 {offsets = [0, 0], sizes = [2, 64], strides = [1, 1]} : vector<2x128xf32> to vector<2x64xf32>
    %34 = arith.addf %32, %33 : vector<2x64xf32>
    %35 = arith.negf %34 : vector<2x64xf32>
    %36 = math.exp %35 : vector<2x64xf32>
    %cst_10 = arith.constant 1.000000e+00 : f32
    %37 = vector.broadcast %cst_10 : f32 to vector<2x64xf32>
    %38 = arith.addf %37, %36 : vector<2x64xf32>
    %39 = arith.divf %37, %38 : vector<2x64xf32>
    %40 = vector.extract_strided_slice %39 {offsets = [0, 0], sizes = [2, 32], strides = [1, 1]} : vector<2x64xf32> to vector<2x32xf32>
    %41 = vector.extract_strided_slice %39 {offsets = [0, 32], sizes = [2, 32], strides = [1, 1]} : vector<2x64xf32> to vector<2x32xf32>
    %42 = vector.extract_strided_slice %31 {offsets = [0, 64], sizes = [2, 32], strides = [1, 1]} : vector<2x128xf32> to vector<2x32xf32>
    %43 = vector.extract_strided_slice %29 {offsets = [0, 64], sizes = [2, 32], strides = [1, 1]} : vector<2x128xf32> to vector<2x32xf32>
    %44 = arith.mulf %40, %43 : vector<2x32xf32>
    %45 = arith.addf %42, %44 : vector<2x32xf32>
    %46 = math.tanh %45 : vector<2x32xf32>
    %47 = arith.subf %27, %46 : vector<2x32xf32>
    %48 = arith.mulf %41, %47 : vector<2x32xf32>
    %49 = arith.addf %46, %48 : vector<2x32xf32>
    %cst_11 = arith.constant dense<0.000000e+00> : vector<2x128xf32>
    %50 = tpu.matmul %49, %10, %cst_11 {dimension_numbers = #tpu.dot_dimension_numbers<[1], [0], [0], [1], [0, 0, 1, 1], [], []>} : vector<2x32xf32>, vector<32x128xf32>, vector<2x128xf32> -> vector<2x128xf32>
    %51 = arith.addf %50, %3 : vector<2x128xf32>
    %52 = vector.extract_strided_slice %9 {offsets = [0, 2, 0], sizes = [2, 1, 128], strides = [1, 1, 1]} : vector<2x8x128xf32> to vector<2x1x128xf32>
    %53 = vector.shape_cast %52 : vector<2x1x128xf32> to vector<2x128xf32>
    %54 = vector.extract_strided_slice %53 {offsets = [0, 0], sizes = [2, 64], strides = [1, 1]} : vector<2x128xf32> to vector<2x64xf32>
    %55 = vector.extract_strided_slice %51 {offsets = [0, 0], sizes = [2, 64], strides = [1, 1]} : vector<2x128xf32> to vector<2x64xf32>
    %56 = arith.addf %54, %55 : vector<2x64xf32>
    %57 = arith.negf %56 : vector<2x64xf32>
    %58 = math.exp %57 : vector<2x64xf32>
    %cst_12 = arith.constant 1.000000e+00 : f32
    %59 = vector.broadcast %cst_12 : f32 to vector<2x64xf32>
    %60 = arith.addf %59, %58 : vector<2x64xf32>
    %61 = arith.divf %59, %60 : vector<2x64xf32>
    %62 = vector.extract_strided_slice %61 {offsets = [0, 0], sizes = [2, 32], strides = [1, 1]} : vector<2x64xf32> to vector<2x32xf32>
    %63 = vector.extract_strided_slice %61 {offsets = [0, 32], sizes = [2, 32], strides = [1, 1]} : vector<2x64xf32> to vector<2x32xf32>
    %64 = vector.extract_strided_slice %53 {offsets = [0, 64], sizes = [2, 32], strides = [1, 1]} : vector<2x128xf32> to vector<2x32xf32>
    %65 = vector.extract_strided_slice %51 {offsets = [0, 64], sizes = [2, 32], strides = [1, 1]} : vector<2x128xf32> to vector<2x32xf32>
    %66 = arith.mulf %62, %65 : vector<2x32xf32>
    %67 = arith.addf %64, %66 : vector<2x32xf32>
    %68 = math.tanh %67 : vector<2x32xf32>
    %69 = arith.subf %49, %68 : vector<2x32xf32>
    %70 = arith.mulf %63, %69 : vector<2x32xf32>
    %71 = arith.addf %68, %70 : vector<2x32xf32>
    %cst_13 = arith.constant dense<0.000000e+00> : vector<2x128xf32>
    %72 = tpu.matmul %71, %10, %cst_13 {dimension_numbers = #tpu.dot_dimension_numbers<[1], [0], [0], [1], [0, 0, 1, 1], [], []>} : vector<2x32xf32>, vector<32x128xf32>, vector<2x128xf32> -> vector<2x128xf32>
    %73 = arith.addf %72, %3 : vector<2x128xf32>
    %74 = vector.extract_strided_slice %9 {offsets = [0, 3, 0], sizes = [2, 1, 128], strides = [1, 1, 1]} : vector<2x8x128xf32> to vector<2x1x128xf32>
    %75 = vector.shape_cast %74 : vector<2x1x128xf32> to vector<2x128xf32>
    %76 = vector.extract_strided_slice %75 {offsets = [0, 0], sizes = [2, 64], strides = [1, 1]} : vector<2x128xf32> to vector<2x64xf32>
    %77 = vector.extract_strided_slice %73 {offsets = [0, 0], sizes = [2, 64], strides = [1, 1]} : vector<2x128xf32> to vector<2x64xf32>
    %78 = arith.addf %76, %77 : vector<2x64xf32>
    %79 = arith.negf %78 : vector<2x64xf32>
    %80 = math.exp %79 : vector<2x64xf32>
    %cst_14 = arith.constant 1.000000e+00 : f32
    %81 = vector.broadcast %cst_14 : f32 to vector<2x64xf32>
    %82 = arith.addf %81, %80 : vector<2x64xf32>
    %83 = arith.divf %81, %82 : vector<2x64xf32>
    %84 = vector.extract_strided_slice %83 {offsets = [0, 0], sizes = [2, 32], strides = [1, 1]} : vector<2x64xf32> to vector<2x32xf32>
    %85 = vector.extract_strided_slice %83 {offsets = [0, 32], sizes = [2, 32], strides = [1, 1]} : vector<2x64xf32> to vector<2x32xf32>
    %86 = vector.extract_strided_slice %75 {offsets = [0, 64], sizes = [2, 32], strides = [1, 1]} : vector<2x128xf32> to vector<2x32xf32>
    %87 = vector.extract_strided_slice %73 {offsets = [0, 64], sizes = [2, 32], strides = [1, 1]} : vector<2x128xf32> to vector<2x32xf32>
    %88 = arith.mulf %84, %87 : vector<2x32xf32>
    %89 = arith.addf %86, %88 : vector<2x32xf32>
    %90 = math.tanh %89 : vector<2x32xf32>
    %91 = arith.subf %71, %90 : vector<2x32xf32>
    %92 = arith.mulf %85, %91 : vector<2x32xf32>
    %93 = arith.addf %90, %92 : vector<2x32xf32>
    %cst_15 = arith.constant dense<0.000000e+00> : vector<2x128xf32>
    %94 = tpu.matmul %93, %10, %cst_15 {dimension_numbers = #tpu.dot_dimension_numbers<[1], [0], [0], [1], [0, 0, 1, 1], [], []>} : vector<2x32xf32>, vector<32x128xf32>, vector<2x128xf32> -> vector<2x128xf32>
    %95 = arith.addf %94, %3 : vector<2x128xf32>
    %96 = vector.extract_strided_slice %9 {offsets = [0, 4, 0], sizes = [2, 1, 128], strides = [1, 1, 1]} : vector<2x8x128xf32> to vector<2x1x128xf32>
    %97 = vector.shape_cast %96 : vector<2x1x128xf32> to vector<2x128xf32>
    %98 = vector.extract_strided_slice %97 {offsets = [0, 0], sizes = [2, 64], strides = [1, 1]} : vector<2x128xf32> to vector<2x64xf32>
    %99 = vector.extract_strided_slice %95 {offsets = [0, 0], sizes = [2, 64], strides = [1, 1]} : vector<2x128xf32> to vector<2x64xf32>
    %100 = arith.addf %98, %99 : vector<2x64xf32>
    %101 = arith.negf %100 : vector<2x64xf32>
    %102 = math.exp %101 : vector<2x64xf32>
    %cst_16 = arith.constant 1.000000e+00 : f32
    %103 = vector.broadcast %cst_16 : f32 to vector<2x64xf32>
    %104 = arith.addf %103, %102 : vector<2x64xf32>
    %105 = arith.divf %103, %104 : vector<2x64xf32>
    %106 = vector.extract_strided_slice %105 {offsets = [0, 0], sizes = [2, 32], strides = [1, 1]} : vector<2x64xf32> to vector<2x32xf32>
    %107 = vector.extract_strided_slice %105 {offsets = [0, 32], sizes = [2, 32], strides = [1, 1]} : vector<2x64xf32> to vector<2x32xf32>
    %108 = vector.extract_strided_slice %97 {offsets = [0, 64], sizes = [2, 32], strides = [1, 1]} : vector<2x128xf32> to vector<2x32xf32>
    %109 = vector.extract_strided_slice %95 {offsets = [0, 64], sizes = [2, 32], strides = [1, 1]} : vector<2x128xf32> to vector<2x32xf32>
    %110 = arith.mulf %106, %109 : vector<2x32xf32>
    %111 = arith.addf %108, %110 : vector<2x32xf32>
    %112 = math.tanh %111 : vector<2x32xf32>
    %113 = arith.subf %93, %112 : vector<2x32xf32>
    %114 = arith.mulf %107, %113 : vector<2x32xf32>
    %115 = arith.addf %112, %114 : vector<2x32xf32>
    %cst_17 = arith.constant dense<0.000000e+00> : vector<2x128xf32>
    %116 = tpu.matmul %115, %10, %cst_17 {dimension_numbers = #tpu.dot_dimension_numbers<[1], [0], [0], [1], [0, 0, 1, 1], [], []>} : vector<2x32xf32>, vector<32x128xf32>, vector<2x128xf32> -> vector<2x128xf32>
    %117 = arith.addf %116, %3 : vector<2x128xf32>
    %118 = vector.extract_strided_slice %9 {offsets = [0, 5, 0], sizes = [2, 1, 128], strides = [1, 1, 1]} : vector<2x8x128xf32> to vector<2x1x128xf32>
    %119 = vector.shape_cast %118 : vector<2x1x128xf32> to vector<2x128xf32>
    %120 = vector.extract_strided_slice %119 {offsets = [0, 0], sizes = [2, 64], strides = [1, 1]} : vector<2x128xf32> to vector<2x64xf32>
    %121 = vector.extract_strided_slice %117 {offsets = [0, 0], sizes = [2, 64], strides = [1, 1]} : vector<2x128xf32> to vector<2x64xf32>
    %122 = arith.addf %120, %121 : vector<2x64xf32>
    %123 = arith.negf %122 : vector<2x64xf32>
    %124 = math.exp %123 : vector<2x64xf32>
    %cst_18 = arith.constant 1.000000e+00 : f32
    %125 = vector.broadcast %cst_18 : f32 to vector<2x64xf32>
    %126 = arith.addf %125, %124 : vector<2x64xf32>
    %127 = arith.divf %125, %126 : vector<2x64xf32>
    %128 = vector.extract_strided_slice %127 {offsets = [0, 0], sizes = [2, 32], strides = [1, 1]} : vector<2x64xf32> to vector<2x32xf32>
    %129 = vector.extract_strided_slice %127 {offsets = [0, 32], sizes = [2, 32], strides = [1, 1]} : vector<2x64xf32> to vector<2x32xf32>
    %130 = vector.extract_strided_slice %119 {offsets = [0, 64], sizes = [2, 32], strides = [1, 1]} : vector<2x128xf32> to vector<2x32xf32>
    %131 = vector.extract_strided_slice %117 {offsets = [0, 64], sizes = [2, 32], strides = [1, 1]} : vector<2x128xf32> to vector<2x32xf32>
    %132 = arith.mulf %128, %131 : vector<2x32xf32>
    %133 = arith.addf %130, %132 : vector<2x32xf32>
    %134 = math.tanh %133 : vector<2x32xf32>
    %135 = arith.subf %115, %134 : vector<2x32xf32>
    %136 = arith.mulf %129, %135 : vector<2x32xf32>
    %137 = arith.addf %134, %136 : vector<2x32xf32>
    %cst_19 = arith.constant dense<0.000000e+00> : vector<2x128xf32>
    %138 = tpu.matmul %137, %10, %cst_19 {dimension_numbers = #tpu.dot_dimension_numbers<[1], [0], [0], [1], [0, 0, 1, 1], [], []>} : vector<2x32xf32>, vector<32x128xf32>, vector<2x128xf32> -> vector<2x128xf32>
    %139 = arith.addf %138, %3 : vector<2x128xf32>
    %140 = vector.extract_strided_slice %9 {offsets = [0, 6, 0], sizes = [2, 1, 128], strides = [1, 1, 1]} : vector<2x8x128xf32> to vector<2x1x128xf32>
    %141 = vector.shape_cast %140 : vector<2x1x128xf32> to vector<2x128xf32>
    %142 = vector.extract_strided_slice %141 {offsets = [0, 0], sizes = [2, 64], strides = [1, 1]} : vector<2x128xf32> to vector<2x64xf32>
    %143 = vector.extract_strided_slice %139 {offsets = [0, 0], sizes = [2, 64], strides = [1, 1]} : vector<2x128xf32> to vector<2x64xf32>
    %144 = arith.addf %142, %143 : vector<2x64xf32>
    %145 = arith.negf %144 : vector<2x64xf32>
    %146 = math.exp %145 : vector<2x64xf32>
    %cst_20 = arith.constant 1.000000e+00 : f32
    %147 = vector.broadcast %cst_20 : f32 to vector<2x64xf32>
    %148 = arith.addf %147, %146 : vector<2x64xf32>
    %149 = arith.divf %147, %148 : vector<2x64xf32>
    %150 = vector.extract_strided_slice %149 {offsets = [0, 0], sizes = [2, 32], strides = [1, 1]} : vector<2x64xf32> to vector<2x32xf32>
    %151 = vector.extract_strided_slice %149 {offsets = [0, 32], sizes = [2, 32], strides = [1, 1]} : vector<2x64xf32> to vector<2x32xf32>
    %152 = vector.extract_strided_slice %141 {offsets = [0, 64], sizes = [2, 32], strides = [1, 1]} : vector<2x128xf32> to vector<2x32xf32>
    %153 = vector.extract_strided_slice %139 {offsets = [0, 64], sizes = [2, 32], strides = [1, 1]} : vector<2x128xf32> to vector<2x32xf32>
    %154 = arith.mulf %150, %153 : vector<2x32xf32>
    %155 = arith.addf %152, %154 : vector<2x32xf32>
    %156 = math.tanh %155 : vector<2x32xf32>
    %157 = arith.subf %137, %156 : vector<2x32xf32>
    %158 = arith.mulf %151, %157 : vector<2x32xf32>
    %159 = arith.addf %156, %158 : vector<2x32xf32>
    %cst_21 = arith.constant dense<0.000000e+00> : vector<2x128xf32>
    %160 = tpu.matmul %159, %10, %cst_21 {dimension_numbers = #tpu.dot_dimension_numbers<[1], [0], [0], [1], [0, 0, 1, 1], [], []>} : vector<2x32xf32>, vector<32x128xf32>, vector<2x128xf32> -> vector<2x128xf32>
    %161 = arith.addf %160, %3 : vector<2x128xf32>
    %162 = vector.extract_strided_slice %9 {offsets = [0, 7, 0], sizes = [2, 1, 128], strides = [1, 1, 1]} : vector<2x8x128xf32> to vector<2x1x128xf32>
    %163 = vector.shape_cast %162 : vector<2x1x128xf32> to vector<2x128xf32>
    %164 = vector.extract_strided_slice %163 {offsets = [0, 0], sizes = [2, 64], strides = [1, 1]} : vector<2x128xf32> to vector<2x64xf32>
    %165 = vector.extract_strided_slice %161 {offsets = [0, 0], sizes = [2, 64], strides = [1, 1]} : vector<2x128xf32> to vector<2x64xf32>
    %166 = arith.addf %164, %165 : vector<2x64xf32>
    %167 = arith.negf %166 : vector<2x64xf32>
    %168 = math.exp %167 : vector<2x64xf32>
    %cst_22 = arith.constant 1.000000e+00 : f32
    %169 = vector.broadcast %cst_22 : f32 to vector<2x64xf32>
    %170 = arith.addf %169, %168 : vector<2x64xf32>
    %171 = arith.divf %169, %170 : vector<2x64xf32>
    %172 = vector.extract_strided_slice %171 {offsets = [0, 0], sizes = [2, 32], strides = [1, 1]} : vector<2x64xf32> to vector<2x32xf32>
    %173 = vector.extract_strided_slice %171 {offsets = [0, 32], sizes = [2, 32], strides = [1, 1]} : vector<2x64xf32> to vector<2x32xf32>
    %174 = vector.extract_strided_slice %163 {offsets = [0, 64], sizes = [2, 32], strides = [1, 1]} : vector<2x128xf32> to vector<2x32xf32>
    %175 = vector.extract_strided_slice %161 {offsets = [0, 64], sizes = [2, 32], strides = [1, 1]} : vector<2x128xf32> to vector<2x32xf32>
    %176 = arith.mulf %172, %175 : vector<2x32xf32>
    %177 = arith.addf %174, %176 : vector<2x32xf32>
    %178 = math.tanh %177 : vector<2x32xf32>
    %179 = arith.subf %159, %178 : vector<2x32xf32>
    %180 = arith.mulf %173, %179 : vector<2x32xf32>
    %181 = arith.addf %178, %180 : vector<2x32xf32>
    %c0_23 = arith.constant 0 : index
    %c0_24 = arith.constant 0 : index
    %182 = vector.load %arg4[%c0_23, %c0_24] : memref<2x32xf32, #tpu.memory_space<vmem>>, vector<2x32xf32>
    tpu.vector_store %arg4[%c0_23, %c0_24], %181 {strides = array<i32>} : memref<2x32xf32, #tpu.memory_space<vmem>>, vector<2x32xf32>,
    return
  }
}

</mosaic_0001>

<llo_original>
// kernel: question_embedding_forward.1
$region0: #{question_embedding_forward.1}
  #allocation0 [shape = 'u32[]', space=smem, size = 0x4, offset = 0x4, fixed_abs, tag = 'smem constant byte address 0x4 - core index']
  #allocation1 [shape = 'u32[144,128]{1,0:T(1,128)}', space=vmem, size = 0x12000, scoped, tag = 'internal scratch']
  %s0 = inlined_call_operand.hbm [shape: f32[16,32], index: 0, kind: input, shape index: {}]
  %s1 = inlined_call_operand.hbm [shape: f32[32,128], index: 1, kind: input, shape index: {}]
  %s2 = inlined_call_operand.hbm [shape: f32[32,128], index: 2, kind: input, shape index: {}]
  %s3 = inlined_call_operand.vmem [shape: f32[2,128], index: 3, kind: input, shape index: {}]
  %s4 = inlined_call_operand.hbm [shape: f32[2,32], index: 4, kind: output, shape index: {}]
  %s5 = sld [smem:[#allocation0]]
  $region38: #{question_embedding_forward.1} parent=0
    _
  %s7 = ssub.s32 1, %s5
  %s8 = scalar_select 0, %s7, %s5
  $region1: #{question_embedding_forward.1} parent=0
    #allocation2 [shape = 'u8[8192]{0}', space=vmem, size = 0x2000, scoped, tag = 'input window, operand 0, single buffered']
    #allocation3 [shape = 's32[1]{0}', space=sflag, size = 0x4, scoped, tag = 'scoped memory for question_embedding_forward.1']
    #allocation4 [shape = 's32[1]{0}', space=sflag, size = 0x4, scoped, tag = 'scoped memory for question_embedding_forward.1']
    #allocation5 [shape = 'u8[16384]{0}', space=vmem, size = 0x4000, scoped, tag = 'input window, operand 1, single buffered']
    #allocation6 [shape = 's32[1]{0}', space=sflag, size = 0x4, scoped, tag = 'scoped memory for question_embedding_forward.1']
    #allocation7 [shape = 'u8[16384]{0}', space=vmem, size = 0x4000, scoped, tag = 'input window, operand 2, single buffered']
    #allocation8 [shape = 'u8[1024]{0}', space=vmem, size = 0x400, scoped, tag = 'output window, operand 0, single buffered']
    %9 = vsyncpa [#allocation3], 0
    %10 = vsyncpa [#allocation6], 0
    %11 = vsyncpa [#allocation4], 0
    // Predicated region
    $region2: #{question_embedding_forward.1} parent=1 // pred_check
      _
    $region3: #{question_embedding_forward.1} parent=1 // pred_check_branch
      %13 = sbr.rel (0) target = $region5
    $region4: #{question_embedding_forward.1} parent=1 // pred_region
      %s15 = ssub.s32 256, 256
      %16 = vsyncadd [#allocation3], %s15
      %s17 = sshll.u32 [#allocation2], 4
      %s18 = int_to_ptr.vmem [resolvable:$true] %s17
      %23 = dma.hbm_to_vmem [thread:$0]  %s0, 256, %s18, [#allocation3], 128, 128, 8
    $region5: #{question_embedding_forward.1} parent=1 // pred_fallthru
      _
    // Predicated region
    $region6: #{question_embedding_forward.1} parent=1 // pred_check
      _
    $region7: #{question_embedding_forward.1} parent=1 // pred_check_branch
      %25 = sbr.rel (0) target = $region9
    $region8: #{question_embedding_forward.1} parent=1 // pred_region
      %s27 = ssub.s32 512, 512
      %28 = vsyncadd [#allocation6], %s27
      %s29 = sshll.u32 [#allocation5], 4
      %s30 = int_to_ptr.vmem [resolvable:$true] %s29
      %35 = dma.hbm_to_vmem [thread:$0]  %s1, 512, %s30, [#allocation6], 128, 128, 8
    $region9: #{question_embedding_forward.1} parent=1 // pred_fallthru
      _
    // Predicated region
    $region10: #{question_embedding_forward.1} parent=1 // pred_check
      _
    $region11: #{question_embedding_forward.1} parent=1 // pred_check_branch
      %37 = sbr.rel (0) target = $region13
    $region12: #{question_embedding_forward.1} parent=1 // pred_region
      %s39 = ssub.s32 512, 512
      %40 = vsyncadd [#allocation6], %s39
      %s41 = sshll.u32 [#allocation7], 4
      %s42 = int_to_ptr.vmem [resolvable:$true] %s41
      %47 = dma.hbm_to_vmem [thread:$0]  %s2, 512, %s42, [#allocation6], 128, 128, 8
    $region13: #{question_embedding_forward.1} parent=1 // pred_fallthru
      _
    // Predicated region
    $region14: #{question_embedding_forward.1} parent=1 // pred_check
      _
    $region15: #{question_embedding_forward.1} parent=1 // pred_check_branch
      %49 = sbr.rel (0) target = $region17
    $region16: #{question_embedding_forward.1} parent=1 // pred_region
      _
    $region17: #{question_embedding_forward.1} parent=1 // pred_fallthru
      _
    // Predicated region
    $region18: #{question_embedding_forward.1} parent=1 // pred_check
      _
    $region19: #{question_embedding_forward.1} parent=1 // pred_check_branch
      %51 = sbr.rel (0) target = $region21
    $region20: #{question_embedding_forward.1} parent=1 // pred_region
      %52 = dma.done [#allocation3], 256
    $region21: #{question_embedding_forward.1} parent=1 // pred_fallthru
      _
    // Predicated region
    $region22: #{question_embedding_forward.1} parent=1 // pred_check
      _
    $region23: #{question_embedding_forward.1} parent=1 // pred_check_branch
      %54 = sbr.rel (0) target = $region25
    $region24: #{question_embedding_forward.1} parent=1 // pred_region
      %55 = dma.done [#allocation6], 512
    $region25: #{question_embedding_forward.1} parent=1 // pred_fallthru
      _
    // Predicated region
    $region26: #{question_embedding_forward.1} parent=1 // pred_check
      _
    $region27: #{question_embedding_forward.1} parent=1 // pred_check_branch
      %57 = sbr.rel (0) target = $region29
    $region28: #{question_embedding_forward.1} parent=1 // pred_region
      %58 = dma.done [#allocation6], 512
    $region29: #{question_embedding_forward.1} parent=1 // pred_fallthru
      _
    %v59 = vld [vmem:[%s3] sm:$0x1]
    %v60 = vld [vmem:[%s3 + $0x1] sm:$0x1]
    %v61 = vlaneseq
    %v62 = vshrl.u32 %v61, 7
    %v63 = vsub.s32 0, %v62
    %v64 = vrot.slane %v60, %v63
    %v65 = vld [vmem:[#allocation2] sm:$0xff]
    %v66 = vld [vmem:[#allocation2 + $0x8] sm:$0xff]
    %v67 = vld [vmem:[#allocation5] sm:$0xff]
    %v68 = vld [vmem:[#allocation5 + $0x8] sm:$0xff]
    %v69 = vld [vmem:[#allocation5 + $0x10] sm:$0xff]
    %v70 = vld [vmem:[#allocation5 + $0x18] sm:$0xff]
    %v71 = vlaneseq
    %v72 = vshrl.u32 %v71, 7
    %v73 = vsub.s32 0, %v72
    %v74 = vrot.slane %v59, %v73
    %vm75 = vcmask 261120
    %v77 = vsel %vm75, %v65, 0
    %v80 = vsel %vm75, %v66, 0
    %82 = vmatprep.subr.mxu0 0.0
    %83 = vmatpush1.msra.mxu0 %v67
    %84 = vmatprep.subr.mxu0 0.0
    %85 = vmatpush1.msra.mxu0 %v68
    %86 = vmatprep.subr.mxu0 0.0
    %87 = vmatpush1.msra.mxu0 %v69
    %88 = vmatprep.subr.mxu0 0.0
    %89 = vmatpush1.msra.mxu0 %v70
    %90 = vmatprep.subr.mxu0 0.0
    %91 = vmatpush1.msra.mxu0 0.0
    %92 = vmatprep.subr.mxu0 0.0
    %93 = vmatpush1.msra.mxu0 0.0
    %94 = vmatprep.subr.mxu0 0.0
    %95 = vmatpush1.msra.mxu0 0.0
    %96 = vmatprep.subr.mxu0 0.0
    %97 = vmatpush1.msra.mxu0 0.0
    %98 = vmatprep.subr.mxu0 0.0
    %99 = vmatpush1.msra.mxu0 0.0
    %100 = vmatprep.subr.mxu0 0.0
    %101 = vmatpush1.msra.mxu0 0.0
    %102 = vmatprep.subr.mxu0 0.0
    %103 = vmatpush1.msra.mxu0 0.0
    %104 = vmatprep.subr.mxu0 0.0
    %105 = vmatpush1.msra.mxu0 0.0
    %106 = vmatprep.subr.mxu0 0.0
    %107 = vmatpush1.msra.mxu0 0.0
    %108 = vmatprep.subr.mxu0 0.0
    %109 = vmatpush1.msra.mxu0 0.0
    %110 = vmatprep.subr.mxu0 0.0
    %111 = vmatpush1.msra.mxu0 0.0
    %112 = vmatprep.subr.mxu0 0.0
    %113 = vmatpush1.msra.mxu0 0.0
    %114 = vmatprep.subr.mxu0 0.0
    %115 = vmatpush1.msra.mxu0 0.0
    %116 = vmatprep.subr.mxu0 0.0
    %117 = vmatpush1.msra.mxu0 0.0
    %118 = vmatprep.subr.mxu0 0.0
    %119 = vmatpush1.msra.mxu0 0.0
    %120 = vmatprep.subr.mxu0 0.0
    %121 = vmatpush1.msra.mxu0 0.0
    %122 = vmatprep.subr.mxu0 0.0
    %123 = vmatpush1.msra.mxu0 0.0
    %124 = vmatprep.subr.mxu0 0.0
    %125 = vmatpush1.msra.mxu0 0.0
    %126 = vmatprep.subr.mxu0 0.0
    %127 = vmatpush1.msra.mxu0 0.0
    %128 = vmatprep.subr.mxu0 0.0
    %129 = vmatpush1.msra.mxu0 0.0
    %130 = vmatprep.subr.mxu0 0.0
    %131 = vmatpush1.msra.mxu0 0.0
    %132 = vmatprep.subr.mxu0 0.0
    %133 = vmatpush1.msra.mxu0 0.0
    %134 = vmatprep.subr.mxu0 0.0
    %135 = vmatpush1.msra.mxu0 0.0
    %136 = vmatprep.subr.mxu0 0.0
    %137 = vmatpush1.msra.mxu0 0.0
    %138 = vmatprep.subr.mxu0 0.0
    %139 = vmatpush1.msra.mxu0 0.0
    %140 = vmatprep.subr.mxu0 0.0
    %141 = vmatpush1.msra.mxu0 0.0
    %142 = vmatprep.subr.mxu0 0.0
    %143 = vmatpush1.msra.mxu0 0.0
    %144 = vmatprep.subr.mxu0 0.0
    %145 = vmatpush1.msra.mxu0 0.0
    %146 = vmatprep.mubr.f32.mxu0 0.0
    %147 = vmatmul.mubr.f32.gmra.mrb[0].mxu0 %v77
    %v148 = vpop.f32.mrb[0].mxu0
    %v149 = vadd.f32 %v74, %v148
    %v150 = vpop.f32.mrb[0].mxu0
    %151 = vmatprep.mubr.f32.mxu0 0.0
    %152 = vmatmul.mubr.f32.gmra.mrb[0].mxu0 %v80
    %v153 = vpop.f32.mrb[0].mxu0
    %v154 = vadd.f32 %v74, %v153
    %v155 = vpop.f32.mrb[0].mxu0
    %156 = vdwg.mxu0
    %v157 = vld [vmem:[#allocation7] sm:$0xff]
    %v158 = vld [vmem:[#allocation7 + $0x8] sm:$0xff]
    %v159 = vld [vmem:[#allocation7 + $0x10] sm:$0xff]
    %v160 = vld [vmem:[#allocation7 + $0x18] sm:$0xff]
    %v161 = vxor.u32 %v149, 2147483648
    %v162 = vxor.u32 %v154, 2147483648
    %v163 = vmul.f32 %v161, 1.442695
    %v164 = vpow.pop %v163
    %v165 = vmul.f32 %v162, 1.442695
    %v166 = vpow.pop %v165
    %v167 = vadd.f32 %v164, 1.0
    %v168 = vadd.f32 %v166, 1.0
    %v169 = vrcp.pop %v167
    %v170 = vmul.f32 1.0, %v169
    %v171 = vrcp.pop %v168
    %v172 = vmul.f32 1.0, %v171
    %174 = vrot.lane.b32.xlu0 %v64, 64
    %v175 = vpop.permute.xlu0 %174
    %v177 = vmul.f32 %v170, %v175
    %v178 = vmul.f32 %v172, %v175
    %181 = vrot.lane.b32.xlu0 %v177, 64
    %v182 = vpop.permute.xlu0 %181
    %183 = vrot.lane.b32.xlu0 %v178, 64
    %v184 = vpop.permute.xlu0 %183
    %v187 = vadd.f32 %v149, %v182
    %v188 = vadd.f32 %v154, %v184
    %v189 = vtanh.pop %v187
    %v190 = vtanh.pop %v188
    %193 = vrot.lane.b32.xlu0 %v189, 96
    %v194 = vpop.permute.xlu0 %193
    %195 = vrot.lane.b32.xlu0 %v190, 96
    %v196 = vpop.permute.xlu0 %195
    %v199 = vmul.f32 %v170, %v194
    %v200 = vmul.f32 %v172, %v196
    %203 = vrot.lane.b32.xlu0 %v199, 32
    %v204 = vpop.permute.xlu0 %203
    %205 = vrot.lane.b32.xlu0 %v200, 32
    %v206 = vpop.permute.xlu0 %205
    %v209 = vsub.f32 %v189, %v204
    %v210 = vsub.f32 %v190, %v206
    %v213 = vrot.slane %v210, 7
    %vm214 = vcmask 1041409
    %v215 = vsel %vm214, %v213, %v209
    %216 = vrot.lane.b32.xlu0 %v215, 64
    %v217 = vpop.permute.xlu0 %216
    %v218 = vsel %vm75, %v217, 0
    %220 = vmatprep.subr.mxu0 0.0
    %221 = vmatpush1.msra.mxu0 %v157
    %222 = vmatprep.subr.mxu0 0.0
    %223 = vmatpush1.msra.mxu0 %v158
    %224 = vmatprep.subr.mxu0 0.0
    %225 = vmatpush1.msra.mxu0 %v159
    %226 = vmatprep.subr.mxu0 0.0
    %227 = vmatpush1.msra.mxu0 %v160
    %228 = vmatprep.subr.mxu0 0.0
    %229 = vmatpush1.msra.mxu0 0.0
    %230 = vmatprep.subr.mxu0 0.0
    %231 = vmatpush1.msra.mxu0 0.0
    %232 = vmatprep.subr.mxu0 0.0
    %233 = vmatpush1.msra.mxu0 0.0
    %234 = vmatprep.subr.mxu0 0.0
    %235 = vmatpush1.msra.mxu0 0.0
    %236 = vmatprep.subr.mxu0 0.0
    %237 = vmatpush1.msra.mxu0 0.0
    %238 = vmatprep.subr.mxu0 0.0
    %239 = vmatpush1.msra.mxu0 0.0
    %240 = vmatprep.subr.mxu0 0.0
    %241 = vmatpush1.msra.mxu0 0.0
    %242 = vmatprep.subr.mxu0 0.0
    %243 = vmatpush1.msra.mxu0 0.0
    %244 = vmatprep.subr.mxu0 0.0
    %245 = vmatpush1.msra.mxu0 0.0
    %246 = vmatprep.subr.mxu0 0.0
    %247 = vmatpush1.msra.mxu0 0.0
    %248 = vmatprep.subr.mxu0 0.0
    %249 = vmatpush1.msra.mxu0 0.0
    %250 = vmatprep.subr.mxu0 0.0
    %251 = vmatpush1.msra.mxu0 0.0
    %252 = vmatprep.subr.mxu0 0.0
    %253 = vmatpush1.msra.mxu0 0.0
    %254 = vmatprep.subr.mxu0 0.0
    %255 = vmatpush1.msra.mxu0 0.0
    %256 = vmatprep.subr.mxu0 0.0
    %257 = vmatpush1.msra.mxu0 0.0
    %258 = vmatprep.subr.mxu0 0.0
    %259 = vmatpush1.msra.mxu0 0.0
    %260 = vmatprep.subr.mxu0 0.0
    %261 = vmatpush1.msra.mxu0 0.0
    %262 = vmatprep.subr.mxu0 0.0
    %263 = vmatpush1.msra.mxu0 0.0
    %264 = vmatprep.subr.mxu0 0.0
    %265 = vmatpush1.msra.mxu0 0.0
    %266 = vmatprep.subr.mxu0 0.0
    %267 = vmatpush1.msra.mxu0 0.0
    %268 = vmatprep.subr.mxu0 0.0
    %269 = vmatpush1.msra.mxu0 0.0
    %270 = vmatprep.subr.mxu0 0.0
    %271 = vmatpush1.msra.mxu0 0.0
    %272 = vmatprep.subr.mxu0 0.0
    %273 = vmatpush1.msra.mxu0 0.0
    %274 = vmatprep.subr.mxu0 0.0
    %275 = vmatpush1.msra.mxu0 0.0
    %276 = vmatprep.subr.mxu0 0.0
    %277 = vmatpush1.msra.mxu0 0.0
    %278 = vmatprep.subr.mxu0 0.0
    %279 = vmatpush1.msra.mxu0 0.0
    %280 = vmatprep.subr.mxu0 0.0
    %281 = vmatpush1.msra.mxu0 0.0
    %282 = vmatprep.subr.mxu0 0.0
    %283 = vmatpush1.msra.mxu0 0.0
    %284 = vmatprep.mubr.f32.mxu0 0.0
    %285 = vmatmul.mubr.f32.gmra.mrb[0].mxu0 %v218
    %v286 = vpop.f32.mrb[0].mxu0
    %v287 = vadd.f32 %v64, %v286
    %v288 = vpop.f32.mrb[0].mxu0
    %289 = vdwg.mxu0
    %v291 = vrot.slane %v287, 7
    %v294 = vadd.f32 %v149, %v291
    %v295 = vadd.f32 %v154, %v287
    %v296 = vxor.u32 %v294, 2147483648
    %v297 = vxor.u32 %v295, 2147483648
    %v298 = vmul.f32 %v296, 1.442695
    %v299 = vpow.pop %v298
    %v300 = vmul.f32 %v297, 1.442695
    %v301 = vpow.pop %v300
    %v302 = vadd.f32 %v299, 1.0
    %v303 = vadd.f32 %v301, 1.0
    %v304 = vrcp.pop %v302
    %v305 = vmul.f32 1.0, %v304
    %v306 = vrcp.pop %v303
    %v307 = vmul.f32 1.0, %v306
    %308 = vrot.lane.b32.xlu0 %v291, 64
    %v309 = vpop.permute.xlu0 %308
    %310 = vrot.lane.b32.xlu0 %v287, 64
    %v311 = vpop.permute.xlu0 %310
    %v314 = vmul.f32 %v305, %v309
    %v315 = vmul.f32 %v307, %v311
    %318 = vrot.lane.b32.xlu0 %v314, 64
    %v319 = vpop.permute.xlu0 %318
    %320 = vrot.lane.b32.xlu0 %v315, 64
    %v321 = vpop.permute.xlu0 %320
    %v324 = vadd.f32 %v149, %v319
    %v325 = vadd.f32 %v154, %v321
    %v326 = vtanh.pop %v324
    %v327 = vtanh.pop %v325
    %v330 = vrot.slane %v326, 1
    %v331 = vrot.slane %v327, 1
    %v334 = vsub.f32 %v209, %v330
    %v335 = vsub.f32 %v210, %v331
    %v338 = vrot.slane %v334, 7
    %v339 = vrot.slane %v335, 7
    %340 = vrot.lane.b32.xlu0 %v338, 96
    %v341 = vpop.permute.xlu0 %340
    %342 = vrot.lane.b32.xlu0 %v339, 96
    %v343 = vpop.permute.xlu0 %342
    %v346 = vmul.f32 %v305, %v341
    %v347 = vmul.f32 %v307, %v343
    %350 = vrot.lane.b32.xlu0 %v346, 32
    %v351 = vpop.permute.xlu0 %350
    %352 = vrot.lane.b32.xlu0 %v347, 32
    %v353 = vpop.permute.xlu0 %352
    %v356 = vadd.f32 %v326, %v351
    %v357 = vadd.f32 %v327, %v353
    %v360 = vrot.slane %v356, 1
    %v361 = vsel %vm214, %v357, %v360
    %362 = vrot.lane.b32.xlu0 %v361, 64
    %v363 = vpop.permute.xlu0 %362
    %v364 = vsel %vm75, %v363, 0
    %366 = vmatprep.subr.mxu0 0.0
    %367 = vmatpush1.msra.mxu0 %v157
    %368 = vmatprep.subr.mxu0 0.0
    %369 = vmatpush1.msra.mxu0 %v158
    %370 = vmatprep.subr.mxu0 0.0
    %371 = vmatpush1.msra.mxu0 %v159
    %372 = vmatprep.subr.mxu0 0.0
    %373 = vmatpush1.msra.mxu0 %v160
    %374 = vmatprep.subr.mxu0 0.0
    %375 = vmatpush1.msra.mxu0 0.0
    %376 = vmatprep.subr.mxu0 0.0
    %377 = vmatpush1.msra.mxu0 0.0
    %378 = vmatprep.subr.mxu0 0.0
    %379 = vmatpush1.msra.mxu0 0.0
    %380 = vmatprep.subr.mxu0 0.0
    %381 = vmatpush1.msra.mxu0 0.0
    %382 = vmatprep.subr.mxu0 0.0
    %383 = vmatpush1.msra.mxu0 0.0
    %384 = vmatprep.subr.mxu0 0.0
    %385 = vmatpush1.msra.mxu0 0.0
    %386 = vmatprep.subr.mxu0 0.0
    %387 = vmatpush1.msra.mxu0 0.0
    %388 = vmatprep.subr.mxu0 0.0
    %389 = vmatpush1.msra.mxu0 0.0
    %390 = vmatprep.subr.mxu0 0.0
    %391 = vmatpush1.msra.mxu0 0.0
    %392 = vmatprep.subr.mxu0 0.0
    %393 = vmatpush1.msra.mxu0 0.0
    %394 = vmatprep.subr.mxu0 0.0
    %395 = vmatpush1.msra.mxu0 0.0
    %396 = vmatprep.subr.mxu0 0.0
    %397 = vmatpush1.msra.mxu0 0.0
    %398 = vmatprep.subr.mxu0 0.0
    %399 = vmatpush1.msra.mxu0 0.0
    %400 = vmatprep.subr.mxu0 0.0
    %401 = vmatpush1.msra.mxu0 0.0
    %402 = vmatprep.subr.mxu0 0.0
    %403 = vmatpush1.msra.mxu0 0.0
    %404 = vmatprep.subr.mxu0 0.0
    %405 = vmatpush1.msra.mxu0 0.0
    %406 = vmatprep.subr.mxu0 0.0
    %407 = vmatpush1.msra.mxu0 0.0
    %408 = vmatprep.subr.mxu0 0.0
    %409 = vmatpush1.msra.mxu0 0.0
    %410 = vmatprep.subr.mxu0 0.0
    %411 = vmatpush1.msra.mxu0 0.0
    %412 = vmatprep.subr.mxu0 0.0
    %413 = vmatpush1.msra.mxu0 0.0
    %414 = vmatprep.subr.mxu0 0.0
    %415 = vmatpush1.msra.mxu0 0.0
    %416 = vmatprep.subr.mxu0 0.0
    %417 = vmatpush1.msra.mxu0 0.0
    %418 = vmatprep.subr.mxu0 0.0
    %419 = vmatpush1.msra.mxu0 0.0
    %420 = vmatprep.subr.mxu0 0.0
    %421 = vmatpush1.msra.mxu0 0.0
    %422 = vmatprep.subr.mxu0 0.0
    %423 = vmatpush1.msra.mxu0 0.0
    %424 = vmatprep.subr.mxu0 0.0
    %425 = vmatpush1.msra.mxu0 0.0
    %426 = vmatprep.subr.mxu0 0.0
    %427 = vmatpush1.msra.mxu0 0.0
    %428 = vmatprep.subr.mxu0 0.0
    %429 = vmatpush1.msra.mxu0 0.0
    %430 = vmatprep.mubr.f32.mxu0 0.0
    %431 = vmatmul.mubr.f32.gmra.mrb[0].mxu0 %v364
    %v432 = vpop.f32.mrb[0].mxu0
    %v433 = vadd.f32 %v64, %v432
    %v434 = vpop.f32.mrb[0].mxu0
    %435 = vdwg.mxu0
    %v437 = vrot.slane %v433, 6
    %v438 = vrot.slane %v433, 7
    %v441 = vadd.f32 %v149, %v437
    %v442 = vadd.f32 %v154, %v438
    %v443 = vxor.u32 %v441, 2147483648
    %v444 = vxor.u32 %v442, 2147483648
    %v445 = vmul.f32 %v443, 1.442695
    %v446 = vpow.pop %v445
    %v447 = vmul.f32 %v444, 1.442695
    %v448 = vpow.pop %v447
    %v449 = vadd.f32 %v446, 1.0
    %v450 = vadd.f32 %v448, 1.0
    %v451 = vrcp.pop %v449
    %v452 = vmul.f32 1.0, %v451
    %v453 = vrcp.pop %v450
    %v454 = vmul.f32 1.0, %v453
    %455 = vrot.lane.b32.xlu0 %v437, 64
    %v456 = vpop.permute.xlu0 %455
    %457 = vrot.lane.b32.xlu0 %v438, 64
    %v458 = vpop.permute.xlu0 %457
    %v461 = vmul.f32 %v452, %v456
    %v462 = vmul.f32 %v454, %v458
    %465 = vrot.lane.b32.xlu0 %v461, 64
    %v466 = vpop.permute.xlu0 %465
    %467 = vrot.lane.b32.xlu0 %v462, 64
    %v468 = vpop.permute.xlu0 %467
    %v471 = vadd.f32 %v149, %v466
    %v472 = vadd.f32 %v154, %v468
    %v473 = vtanh.pop %v471
    %v474 = vtanh.pop %v472
    %v477 = vrot.slane %v473, 1
    %v478 = vrot.slane %v474, 1
    %v481 = vsub.f32 %v356, %v477
    %v482 = vsub.f32 %v357, %v478
    %v485 = vrot.slane %v481, 7
    %v486 = vrot.slane %v482, 7
    %487 = vrot.lane.b32.xlu0 %v485, 96
    %v488 = vpop.permute.xlu0 %487
    %489 = vrot.lane.b32.xlu0 %v486, 96
    %v490 = vpop.permute.xlu0 %489
    %v493 = vmul.f32 %v452, %v488
    %v494 = vmul.f32 %v454, %v490
    %497 = vrot.lane.b32.xlu0 %v493, 32
    %v498 = vpop.permute.xlu0 %497
    %499 = vrot.lane.b32.xlu0 %v494, 32
    %v500 = vpop.permute.xlu0 %499
    %v503 = vadd.f32 %v473, %v498
    %v504 = vadd.f32 %v474, %v500
    %v507 = vrot.slane %v503, 2
    %v508 = vrot.slane %v504, 1
    %v509 = vsel %vm214, %v508, %v507
    %510 = vrot.lane.b32.xlu0 %v509, 64
    %v511 = vpop.permute.xlu0 %510
    %v512 = vsel %vm75, %v511, 0
    %514 = vmatprep.subr.mxu0 0.0
    %515 = vmatpush1.msra.mxu0 %v157
    %516 = vmatprep.subr.mxu0 0.0
    %517 = vmatpush1.msra.mxu0 %v158
    %518 = vmatprep.subr.mxu0 0.0
    %519 = vmatpush1.msra.mxu0 %v159
    %520 = vmatprep.subr.mxu0 0.0
    %521 = vmatpush1.msra.mxu0 %v160
    %522 = vmatprep.subr.mxu0 0.0
    %523 = vmatpush1.msra.mxu0 0.0
    %524 = vmatprep.subr.mxu0 0.0
    %525 = vmatpush1.msra.mxu0 0.0
    %526 = vmatprep.subr.mxu0 0.0
    %527 = vmatpush1.msra.mxu0 0.0
    %528 = vmatprep.subr.mxu0 0.0
    %529 = vmatpush1.msra.mxu0 0.0
    %530 = vmatprep.subr.mxu0 0.0
    %531 = vmatpush1.msra.mxu0 0.0
    %532 = vmatprep.subr.mxu0 0.0
    %533 = vmatpush1.msra.mxu0 0.0
    %534 = vmatprep.subr.mxu0 0.0
    %535 = vmatpush1.msra.mxu0 0.0
    %536 = vmatprep.subr.mxu0 0.0
    %537 = vmatpush1.msra.mxu0 0.0
    %538 = vmatprep.subr.mxu0 0.0
    %539 = vmatpush1.msra.mxu0 0.0
    %540 = vmatprep.subr.mxu0 0.0
    %541 = vmatpush1.msra.mxu0 0.0
    %542 = vmatprep.subr.mxu0 0.0
    %543 = vmatpush1.msra.mxu0 0.0
    %544 = vmatprep.subr.mxu0 0.0
    %545 = vmatpush1.msra.mxu0 0.0
    %546 = vmatprep.subr.mxu0 0.0
    %547 = vmatpush1.msra.mxu0 0.0
    %548 = vmatprep.subr.mxu0 0.0
    %549 = vmatpush1.msra.mxu0 0.0
    %550 = vmatprep.subr.mxu0 0.0
    %551 = vmatpush1.msra.mxu0 0.0
    %552 = vmatprep.subr.mxu0 0.0
    %553 = vmatpush1.msra.mxu0 0.0
    %554 = vmatprep.subr.mxu0 0.0
    %555 = vmatpush1.msra.mxu0 0.0
    %556 = vmatprep.subr.mxu0 0.0
    %557 = vmatpush1.msra.mxu0 0.0
    %558 = vmatprep.subr.mxu0 0.0
    %559 = vmatpush1.msra.mxu0 0.0
    %560 = vmatprep.subr.mxu0 0.0
    %561 = vmatpush1.msra.mxu0 0.0
    %562 = vmatprep.subr.mxu0 0.0
    %563 = vmatpush1.msra.mxu0 0.0
    %564 = vmatprep.subr.mxu0 0.0
    %565 = vmatpush1.msra.mxu0 0.0
    %566 = vmatprep.subr.mxu0 0.0
    %567 = vmatpush1.msra.mxu0 0.0
    %568 = vmatprep.subr.mxu0 0.0
    %569 = vmatpush1.msra.mxu0 0.0
    %570 = vmatprep.subr.mxu0 0.0
    %571 = vmatpush1.msra.mxu0 0.0
    %572 = vmatprep.subr.mxu0 0.0
    %573 = vmatpush1.msra.mxu0 0.0
    %574 = vmatprep.subr.mxu0 0.0
    %575 = vmatpush1.msra.mxu0 0.0
    %576 = vmatprep.subr.mxu0 0.0
    %577 = vmatpush1.msra.mxu0 0.0
    %578 = vmatprep.mubr.f32.mxu0 0.0
    %579 = vmatmul.mubr.f32.gmra.mrb[0].mxu0 %v512
    %v580 = vpop.f32.mrb[0].mxu0
    %v581 = vadd.f32 %v64, %v580
    %v582 = vpop.f32.mrb[0].mxu0
    %583 = vdwg.mxu0
    %v585 = vrot.slane %v581, 5
    %v586 = vrot.slane %v581, 6
    %v589 = vadd.f32 %v149, %v585
    %v590 = vadd.f32 %v154, %v586
    %v591 = vxor.u32 %v589, 2147483648
    %v592 = vxor.u32 %v590, 2147483648
    %v593 = vmul.f32 %v591, 1.442695
    %v594 = vpow.pop %v593
    %v595 = vmul.f32 %v592, 1.442695
    %v596 = vpow.pop %v595
    %v597 = vadd.f32 %v594, 1.0
    %v598 = vadd.f32 %v596, 1.0
    %v599 = vrcp.pop %v597
    %v600 = vmul.f32 1.0, %v599
    %v601 = vrcp.pop %v598
    %v602 = vmul.f32 1.0, %v601
    %603 = vrot.lane.b32.xlu0 %v585, 64
    %v604 = vpop.permute.xlu0 %603
    %605 = vrot.lane.b32.xlu0 %v586, 64
    %v606 = vpop.permute.xlu0 %605
    %v609 = vmul.f32 %v600, %v604
    %v610 = vmul.f32 %v602, %v606
    %613 = vrot.lane.b32.xlu0 %v609, 64
    %v614 = vpop.permute.xlu0 %613
    %615 = vrot.lane.b32.xlu0 %v610, 64
    %v616 = vpop.permute.xlu0 %615
    %v619 = vadd.f32 %v149, %v614
    %v620 = vadd.f32 %v154, %v616
    %v621 = vtanh.pop %v619
    %v622 = vtanh.pop %v620
    %v625 = vrot.slane %v621, 1
    %v626 = vrot.slane %v622, 1
    %v629 = vsub.f32 %v503, %v625
    %v630 = vsub.f32 %v504, %v626
    %v633 = vrot.slane %v629, 7
    %v634 = vrot.slane %v630, 7
    %635 = vrot.lane.b32.xlu0 %v633, 96
    %v636 = vpop.permute.xlu0 %635
    %637 = vrot.lane.b32.xlu0 %v634, 96
    %v638 = vpop.permute.xlu0 %637
    %v641 = vmul.f32 %v600, %v636
    %v642 = vmul.f32 %v602, %v638
    %645 = vrot.lane.b32.xlu0 %v641, 32
    %v646 = vpop.permute.xlu0 %645
    %647 = vrot.lane.b32.xlu0 %v642, 32
    %v648 = vpop.permute.xlu0 %647
    %v651 = vadd.f32 %v621, %v646
    %v652 = vadd.f32 %v622, %v648
    %v655 = vrot.slane %v651, 3
    %v656 = vrot.slane %v652, 2
    %v657 = vsel %vm214, %v656, %v655
    %658 = vrot.lane.b32.xlu0 %v657, 64
    %v659 = vpop.permute.xlu0 %658
    %v660 = vsel %vm75, %v659, 0
    %662 = vmatprep.subr.mxu0 0.0
    %663 = vmatpush1.msra.mxu0 %v157
    %664 = vmatprep.subr.mxu0 0.0
    %665 = vmatpush1.msra.mxu0 %v158
    %666 = vmatprep.subr.mxu0 0.0
    %667 = vmatpush1.msra.mxu0 %v159
    %668 = vmatprep.subr.mxu0 0.0
    %669 = vmatpush1.msra.mxu0 %v160
    %670 = vmatprep.subr.mxu0 0.0
    %671 = vmatpush1.msra.mxu0 0.0
    %672 = vmatprep.subr.mxu0 0.0
    %673 = vmatpush1.msra.mxu0 0.0
    %674 = vmatprep.subr.mxu0 0.0
    %675 = vmatpush1.msra.mxu0 0.0
    %676 = vmatprep.subr.mxu0 0.0
    %677 = vmatpush1.msra.mxu0 0.0
    %678 = vmatprep.subr.mxu0 0.0
    %679 = vmatpush1.msra.mxu0 0.0
    %680 = vmatprep.subr.mxu0 0.0
    %681 = vmatpush1.msra.mxu0 0.0
    %682 = vmatprep.subr.mxu0 0.0
    %683 = vmatpush1.msra.mxu0 0.0
    %684 = vmatprep.subr.mxu0 0.0
    %685 = vmatpush1.msra.mxu0 0.0
    %686 = vmatprep.subr.mxu0 0.0
    %687 = vmatpush1.msra.mxu0 0.0
    %688 = vmatprep.subr.mxu0 0.0
    %689 = vmatpush1.msra.mxu0 0.0
    %690 = vmatprep.subr.mxu0 0.0
    %691 = vmatpush1.msra.mxu0 0.0
    %692 = vmatprep.subr.mxu0 0.0
    %693 = vmatpush1.msra.mxu0 0.0
    %694 = vmatprep.subr.mxu0 0.0
    %695 = vmatpush1.msra.mxu0 0.0
    %696 = vmatprep.subr.mxu0 0.0
    %697 = vmatpush1.msra.mxu0 0.0
    %698 = vmatprep.subr.mxu0 0.0
    %699 = vmatpush1.msra.mxu0 0.0
    %700 = vmatprep.subr.mxu0 0.0
    %701 = vmatpush1.msra.mxu0 0.0
    %702 = vmatprep.subr.mxu0 0.0
    %703 = vmatpush1.msra.mxu0 0.0
    %704 = vmatprep.subr.mxu0 0.0
    %705 = vmatpush1.msra.mxu0 0.0
    %706 = vmatprep.subr.mxu0 0.0
    %707 = vmatpush1.msra.mxu0 0.0
    %708 = vmatprep.subr.mxu0 0.0
    %709 = vmatpush1.msra.mxu0 0.0
    %710 = vmatprep.subr.mxu0 0.0
    %711 = vmatpush1.msra.mxu0 0.0
    %712 = vmatprep.subr.mxu0 0.0
    %713 = vmatpush1.msra.mxu0 0.0
    %714 = vmatprep.subr.mxu0 0.0
    %715 = vmatpush1.msra.mxu0 0.0
    %716 = vmatprep.subr.mxu0 0.0
    %717 = vmatpush1.msra.mxu0 0.0
    %718 = vmatprep.subr.mxu0 0.0
    %719 = vmatpush1.msra.mxu0 0.0
    %720 = vmatprep.subr.mxu0 0.0
    %721 = vmatpush1.msra.mxu0 0.0
    %722 = vmatprep.subr.mxu0 0.0
    %723 = vmatpush1.msra.mxu0 0.0
    %724 = vmatprep.subr.mxu0 0.0
    %725 = vmatpush1.msra.mxu0 0.0
    %726 = vmatprep.mubr.f32.mxu0 0.0
    %727 = vmatmul.mubr.f32.gmra.mrb[0].mxu0 %v660
    %v728 = vpop.f32.mrb[0].mxu0
    %v729 = vadd.f32 %v64, %v728
    %v730 = vpop.f32.mrb[0].mxu0
    %731 = vdwg.mxu0
    %v733 = vrot.slane %v729, 4
    %v734 = vrot.slane %v729, 5
    %v737 = vadd.f32 %v149, %v733
    %v738 = vadd.f32 %v154, %v734
    %v739 = vxor.u32 %v737, 2147483648
    %v740 = vxor.u32 %v738, 2147483648
    %v741 = vmul.f32 %v739, 1.442695
    %v742 = vpow.pop %v741
    %v743 = vmul.f32 %v740, 1.442695
    %v744 = vpow.pop %v743
    %v745 = vadd.f32 %v742, 1.0
    %v746 = vadd.f32 %v744, 1.0
    %v747 = vrcp.pop %v745
    %v748 = vmul.f32 1.0, %v747
    %v749 = vrcp.pop %v746
    %v750 = vmul.f32 1.0, %v749
    %751 = vrot.lane.b32.xlu0 %v733, 64
    %v752 = vpop.permute.xlu0 %751
    %753 = vrot.lane.b32.xlu0 %v734, 64
    %v754 = vpop.permute.xlu0 %753
    %v757 = vmul.f32 %v748, %v752
    %v758 = vmul.f32 %v750, %v754
    %761 = vrot.lane.b32.xlu0 %v757, 64
    %v762 = vpop.permute.xlu0 %761
    %763 = vrot.lane.b32.xlu0 %v758, 64
    %v764 = vpop.permute.xlu0 %763
    %v767 = vadd.f32 %v149, %v762
    %v768 = vadd.f32 %v154, %v764
    %v769 = vtanh.pop %v767
    %v770 = vtanh.pop %v768
    %v773 = vrot.slane %v769, 1
    %v774 = vrot.slane %v770, 1
    %v777 = vsub.f32 %v651, %v773
    %v778 = vsub.f32 %v652, %v774
    %v781 = vrot.slane %v777, 7
    %v782 = vrot.slane %v778, 7
    %783 = vrot.lane.b32.xlu0 %v781, 96
    %v784 = vpop.permute.xlu0 %783
    %785 = vrot.lane.b32.xlu0 %v782, 96
    %v786 = vpop.permute.xlu0 %785
    %v789 = vmul.f32 %v748, %v784
    %v790 = vmul.f32 %v750, %v786
    %793 = vrot.lane.b32.xlu0 %v789, 32
    %v794 = vpop.permute.xlu0 %793
    %795 = vrot.lane.b32.xlu0 %v790, 32
    %v796 = vpop.permute.xlu0 %795
    %v799 = vadd.f32 %v769, %v794
    %v800 = vadd.f32 %v770, %v796
    %v803 = vrot.slane %v799, 4
    %v804 = vrot.slane %v800, 3
    %v805 = vsel %vm214, %v804, %v803
    %806 = vrot.lane.b32.xlu0 %v805, 64
    %v807 = vpop.permute.xlu0 %806
    %v808 = vsel %vm75, %v807, 0
    %810 = vmatprep.subr.mxu0 0.0
    %811 = vmatpush1.msra.mxu0 %v157
    %812 = vmatprep.subr.mxu0 0.0
    %813 = vmatpush1.msra.mxu0 %v158
    %814 = vmatprep.subr.mxu0 0.0
    %815 = vmatpush1.msra.mxu0 %v159
    %816 = vmatprep.subr.mxu0 0.0
    %817 = vmatpush1.msra.mxu0 %v160
    %818 = vmatprep.subr.mxu0 0.0
    %819 = vmatpush1.msra.mxu0 0.0
    %820 = vmatprep.subr.mxu0 0.0
    %821 = vmatpush1.msra.mxu0 0.0
    %822 = vmatprep.subr.mxu0 0.0
    %823 = vmatpush1.msra.mxu0 0.0
    %824 = vmatprep.subr.mxu0 0.0
    %825 = vmatpush1.msra.mxu0 0.0
    %826 = vmatprep.subr.mxu0 0.0
    %827 = vmatpush1.msra.mxu0 0.0
    %828 = vmatprep.subr.mxu0 0.0
    %829 = vmatpush1.msra.mxu0 0.0
    %830 = vmatprep.subr.mxu0 0.0
    %831 = vmatpush1.msra.mxu0 0.0
    %832 = vmatprep.subr.mxu0 0.0
    %833 = vmatpush1.msra.mxu0 0.0
    %834 = vmatprep.subr.mxu0 0.0
    %835 = vmatpush1.msra.mxu0 0.0
    %836 = vmatprep.subr.mxu0 0.0
    %837 = vmatpush1.msra.mxu0 0.0
    %838 = vmatprep.subr.mxu0 0.0
    %839 = vmatpush1.msra.mxu0 0.0
    %840 = vmatprep.subr.mxu0 0.0
    %841 = vmatpush1.msra.mxu0 0.0
    %842 = vmatprep.subr.mxu0 0.0
    %843 = vmatpush1.msra.mxu0 0.0
    %844 = vmatprep.subr.mxu0 0.0
    %845 = vmatpush1.msra.mxu0 0.0
    %846 = vmatprep.subr.mxu0 0.0
    %847 = vmatpush1.msra.mxu0 0.0
    %848 = vmatprep.subr.mxu0 0.0
    %849 = vmatpush1.msra.mxu0 0.0
    %850 = vmatprep.subr.mxu0 0.0
    %851 = vmatpush1.msra.mxu0 0.0
    %852 = vmatprep.subr.mxu0 0.0
    %853 = vmatpush1.msra.mxu0 0.0
    %854 = vmatprep.subr.mxu0 0.0
    %855 = vmatpush1.msra.mxu0 0.0
    %856 = vmatprep.subr.mxu0 0.0
    %857 = vmatpush1.msra.mxu0 0.0
    %858 = vmatprep.subr.mxu0 0.0
    %859 = vmatpush1.msra.mxu0 0.0
    %860 = vmatprep.subr.mxu0 0.0
    %861 = vmatpush1.msra.mxu0 0.0
    %862 = vmatprep.subr.mxu0 0.0
    %863 = vmatpush1.msra.mxu0 0.0
    %864 = vmatprep.subr.mxu0 0.0
    %865 = vmatpush1.msra.mxu0 0.0
    %866 = vmatprep.subr.mxu0 0.0
    %867 = vmatpush1.msra.mxu0 0.0
    %868 = vmatprep.subr.mxu0 0.0
    %869 = vmatpush1.msra.mxu0 0.0
    %870 = vmatprep.subr.mxu0 0.0
    %871 = vmatpush1.msra.mxu0 0.0
    %872 = vmatprep.subr.mxu0 0.0
    %873 = vmatpush1.msra.mxu0 0.0
    %874 = vmatprep.mubr.f32.mxu0 0.0
    %875 = vmatmul.mubr.f32.gmra.mrb[0].mxu0 %v808
    %v876 = vpop.f32.mrb[0].mxu0
    %v877 = vadd.f32 %v64, %v876
    %v878 = vpop.f32.mrb[0].mxu0
    %879 = vdwg.mxu0
    %v881 = vrot.slane %v877, 3
    %v882 = vrot.slane %v877, 4
    %v885 = vadd.f32 %v149, %v881
    %v886 = vadd.f32 %v154, %v882
    %v887 = vxor.u32 %v885, 2147483648
    %v888 = vxor.u32 %v886, 2147483648
    %v889 = vmul.f32 %v887, 1.442695
    %v890 = vpow.pop %v889
    %v891 = vmul.f32 %v888, 1.442695
    %v892 = vpow.pop %v891
    %v893 = vadd.f32 %v890, 1.0
    %v894 = vadd.f32 %v892, 1.0
    %v895 = vrcp.pop %v893
    %v896 = vmul.f32 1.0, %v895
    %v897 = vrcp.pop %v894
    %v898 = vmul.f32 1.0, %v897
    %899 = vrot.lane.b32.xlu0 %v881, 64
    %v900 = vpop.permute.xlu0 %899
    %901 = vrot.lane.b32.xlu0 %v882, 64
    %v902 = vpop.permute.xlu0 %901
    %v905 = vmul.f32 %v896, %v900
    %v906 = vmul.f32 %v898, %v902
    %909 = vrot.lane.b32.xlu0 %v905, 64
    %v910 = vpop.permute.xlu0 %909
    %911 = vrot.lane.b32.xlu0 %v906, 64
    %v912 = vpop.permute.xlu0 %911
    %v915 = vadd.f32 %v149, %v910
    %v916 = vadd.f32 %v154, %v912
    %v917 = vtanh.pop %v915
    %v918 = vtanh.pop %v916
    %v921 = vrot.slane %v917, 1
    %v922 = vrot.slane %v918, 1
    %v925 = vsub.f32 %v799, %v921
    %v926 = vsub.f32 %v800, %v922
    %v929 = vrot.slane %v925, 7
    %v930 = vrot.slane %v926, 7
    %931 = vrot.lane.b32.xlu0 %v929, 96
    %v932 = vpop.permute.xlu0 %931
    %933 = vrot.lane.b32.xlu0 %v930, 96
    %v934 = vpop.permute.xlu0 %933
    %v937 = vmul.f32 %v896, %v932
    %v938 = vmul.f32 %v898, %v934
    %941 = vrot.lane.b32.xlu0 %v937, 32
    %v942 = vpop.permute.xlu0 %941
    %943 = vrot.lane.b32.xlu0 %v938, 32
    %v944 = vpop.permute.xlu0 %943
    %v947 = vadd.f32 %v917, %v942
    %v948 = vadd.f32 %v918, %v944
    %v951 = vrot.slane %v947, 5
    %v952 = vrot.slane %v948, 4
    %v953 = vsel %vm214, %v952, %v951
    %954 = vrot.lane.b32.xlu0 %v953, 64
    %v955 = vpop.permute.xlu0 %954
    %v956 = vsel %vm75, %v955, 0
    %958 = vmatprep.subr.mxu0 0.0
    %959 = vmatpush1.msra.mxu0 %v157
    %960 = vmatprep.subr.mxu0 0.0
    %961 = vmatpush1.msra.mxu0 %v158
    %962 = vmatprep.subr.mxu0 0.0
    %963 = vmatpush1.msra.mxu0 %v159
    %964 = vmatprep.subr.mxu0 0.0
    %965 = vmatpush1.msra.mxu0 %v160
    %966 = vmatprep.subr.mxu0 0.0
    %967 = vmatpush1.msra.mxu0 0.0
    %968 = vmatprep.subr.mxu0 0.0
    %969 = vmatpush1.msra.mxu0 0.0
    %970 = vmatprep.subr.mxu0 0.0
    %971 = vmatpush1.msra.mxu0 0.0
    %972 = vmatprep.subr.mxu0 0.0
    %973 = vmatpush1.msra.mxu0 0.0
    %974 = vmatprep.subr.mxu0 0.0
    %975 = vmatpush1.msra.mxu0 0.0
    %976 = vmatprep.subr.mxu0 0.0
    %977 = vmatpush1.msra.mxu0 0.0
    %978 = vmatprep.subr.mxu0 0.0
    %979 = vmatpush1.msra.mxu0 0.0
    %980 = vmatprep.subr.mxu0 0.0
    %981 = vmatpush1.msra.mxu0 0.0
    %982 = vmatprep.subr.mxu0 0.0
    %983 = vmatpush1.msra.mxu0 0.0
    %984 = vmatprep.subr.mxu0 0.0
    %985 = vmatpush1.msra.mxu0 0.0
    %986 = vmatprep.subr.mxu0 0.0
    %987 = vmatpush1.msra.mxu0 0.0
    %988 = vmatprep.subr.mxu0 0.0
    %989 = vmatpush1.msra.mxu0 0.0
    %990 = vmatprep.subr.mxu0 0.0
    %991 = vmatpush1.msra.mxu0 0.0
    %992 = vmatprep.subr.mxu0 0.0
    %993 = vmatpush1.msra.mxu0 0.0
    %994 = vmatprep.subr.mxu0 0.0
    %995 = vmatpush1.msra.mxu0 0.0
    %996 = vmatprep.subr.mxu0 0.0
    %997 = vmatpush1.msra.mxu0 0.0
    %998 = vmatprep.subr.mxu0 0.0
    %999 = vmatpush1.msra.mxu0 0.0
    %1000 = vmatprep.subr.mxu0 0.0
    %1001 = vmatpush1.msra.mxu0 0.0
    %1002 = vmatprep.subr.mxu0 0.0
    %1003 = vmatpush1.msra.mxu0 0.0
    %1004 = vmatprep.subr.mxu0 0.0
    %1005 = vmatpush1.msra.mxu0 0.0
    %1006 = vmatprep.subr.mxu0 0.0
    %1007 = vmatpush1.msra.mxu0 0.0
    %1008 = vmatprep.subr.mxu0 0.0
    %1009 = vmatpush1.msra.mxu0 0.0
    %1010 = vmatprep.subr.mxu0 0.0
    %1011 = vmatpush1.msra.mxu0 0.0
    %1012 = vmatprep.subr.mxu0 0.0
    %1013 = vmatpush1.msra.mxu0 0.0
    %1014 = vmatprep.subr.mxu0 0.0
    %1015 = vmatpush1.msra.mxu0 0.0
    %1016 = vmatprep.subr.mxu0 0.0
    %1017 = vmatpush1.msra.mxu0 0.0
    %1018 = vmatprep.subr.mxu0 0.0
    %1019 = vmatpush1.msra.mxu0 0.0
    %1020 = vmatprep.subr.mxu0 0.0
    %1021 = vmatpush1.msra.mxu0 0.0
    %1022 = vmatprep.mubr.f32.mxu0 0.0
    %1023 = vmatmul.mubr.f32.gmra.mrb[0].mxu0 %v956
    %v1024 = vpop.f32.mrb[0].mxu0
    %v1025 = vadd.f32 %v64, %v1024
    %v1026 = vpop.f32.mrb[0].mxu0
    %1027 = vdwg.mxu0
    %v1029 = vrot.slane %v1025, 2
    %v1030 = vrot.slane %v1025, 3
    %v1033 = vadd.f32 %v149, %v1029
    %v1034 = vadd.f32 %v154, %v1030
    %v1035 = vxor.u32 %v1033, 2147483648
    %v1036 = vxor.u32 %v1034, 2147483648
    %v1037 = vmul.f32 %v1035, 1.442695
    %v1038 = vpow.pop %v1037
    %v1039 = vmul.f32 %v1036, 1.442695
    %v1040 = vpow.pop %v1039
    %v1041 = vadd.f32 %v1038, 1.0
    %v1042 = vadd.f32 %v1040, 1.0
    %v1043 = vrcp.pop %v1041
    %v1044 = vmul.f32 1.0, %v1043
    %v1045 = vrcp.pop %v1042
    %v1046 = vmul.f32 1.0, %v1045
    %1047 = vrot.lane.b32.xlu0 %v1029, 64
    %v1048 = vpop.permute.xlu0 %1047
    %1049 = vrot.lane.b32.xlu0 %v1030, 64
    %v1050 = vpop.permute.xlu0 %1049
    %v1053 = vmul.f32 %v1044, %v1048
    %v1054 = vmul.f32 %v1046, %v1050
    %1057 = vrot.lane.b32.xlu0 %v1053, 64
    %v1058 = vpop.permute.xlu0 %1057
    %1059 = vrot.lane.b32.xlu0 %v1054, 64
    %v1060 = vpop.permute.xlu0 %1059
    %v1063 = vadd.f32 %v149, %v1058
    %v1064 = vadd.f32 %v154, %v1060
    %v1065 = vtanh.pop %v1063
    %v1066 = vtanh.pop %v1064
    %v1069 = vrot.slane %v1065, 1
    %v1070 = vrot.slane %v1066, 1
    %v1073 = vsub.f32 %v947, %v1069
    %v1074 = vsub.f32 %v948, %v1070
    %v1077 = vrot.slane %v1073, 7
    %v1078 = vrot.slane %v1074, 7
    %1079 = vrot.lane.b32.xlu0 %v1077, 96
    %v1080 = vpop.permute.xlu0 %1079
    %1081 = vrot.lane.b32.xlu0 %v1078, 96
    %v1082 = vpop.permute.xlu0 %1081
    %v1085 = vmul.f32 %v1044, %v1080
    %v1086 = vmul.f32 %v1046, %v1082
    %1089 = vrot.lane.b32.xlu0 %v1085, 32
    %v1090 = vpop.permute.xlu0 %1089
    %1091 = vrot.lane.b32.xlu0 %v1086, 32
    %v1092 = vpop.permute.xlu0 %1091
    %v1095 = vadd.f32 %v1065, %v1090
    %v1096 = vadd.f32 %v1066, %v1092
    %v1099 = vrot.slane %v1095, 6
    %v1100 = vrot.slane %v1096, 5
    %v1101 = vsel %vm214, %v1100, %v1099
    %1102 = vrot.lane.b32.xlu0 %v1101, 64
    %v1103 = vpop.permute.xlu0 %1102
    %v1104 = vsel %vm75, %v1103, 0
    %1106 = vmatprep.subr.mxu0 0.0
    %1107 = vmatpush1.msra.mxu0 %v157
    %1108 = vmatprep.subr.mxu0 0.0
    %1109 = vmatpush1.msra.mxu0 %v158
    %1110 = vmatprep.subr.mxu0 0.0
    %1111 = vmatpush1.msra.mxu0 %v159
    %1112 = vmatprep.subr.mxu0 0.0
    %1113 = vmatpush1.msra.mxu0 %v160
    %1114 = vmatprep.subr.mxu0 0.0
    %1115 = vmatpush1.msra.mxu0 0.0
    %1116 = vmatprep.subr.mxu0 0.0
    %1117 = vmatpush1.msra.mxu0 0.0
    %1118 = vmatprep.subr.mxu0 0.0
    %1119 = vmatpush1.msra.mxu0 0.0
    %1120 = vmatprep.subr.mxu0 0.0
    %1121 = vmatpush1.msra.mxu0 0.0
    %1122 = vmatprep.subr.mxu0 0.0
    %1123 = vmatpush1.msra.mxu0 0.0
    %1124 = vmatprep.subr.mxu0 0.0
    %1125 = vmatpush1.msra.mxu0 0.0
    %1126 = vmatprep.subr.mxu0 0.0
    %1127 = vmatpush1.msra.mxu0 0.0
    %1128 = vmatprep.subr.mxu0 0.0
    %1129 = vmatpush1.msra.mxu0 0.0
    %1130 = vmatprep.subr.mxu0 0.0
    %1131 = vmatpush1.msra.mxu0 0.0
    %1132 = vmatprep.subr.mxu0 0.0
    %1133 = vmatpush1.msra.mxu0 0.0
    %1134 = vmatprep.subr.mxu0 0.0
    %1135 = vmatpush1.msra.mxu0 0.0
    %1136 = vmatprep.subr.mxu0 0.0
    %1137 = vmatpush1.msra.mxu0 0.0
    %1138 = vmatprep.subr.mxu0 0.0
    %1139 = vmatpush1.msra.mxu0 0.0
    %1140 = vmatprep.subr.mxu0 0.0
    %1141 = vmatpush1.msra.mxu0 0.0
    %1142 = vmatprep.subr.mxu0 0.0
    %1143 = vmatpush1.msra.mxu0 0.0
    %1144 = vmatprep.subr.mxu0 0.0
    %1145 = vmatpush1.msra.mxu0 0.0
    %1146 = vmatprep.subr.mxu0 0.0
    %1147 = vmatpush1.msra.mxu0 0.0
    %1148 = vmatprep.subr.mxu0 0.0
    %1149 = vmatpush1.msra.mxu0 0.0
    %1150 = vmatprep.subr.mxu0 0.0
    %1151 = vmatpush1.msra.mxu0 0.0
    %1152 = vmatprep.subr.mxu0 0.0
    %1153 = vmatpush1.msra.mxu0 0.0
    %1154 = vmatprep.subr.mxu0 0.0
    %1155 = vmatpush1.msra.mxu0 0.0
    %1156 = vmatprep.subr.mxu0 0.0
    %1157 = vmatpush1.msra.mxu0 0.0
    %1158 = vmatprep.subr.mxu0 0.0
    %1159 = vmatpush1.msra.mxu0 0.0
    %1160 = vmatprep.subr.mxu0 0.0
    %1161 = vmatpush1.msra.mxu0 0.0
    %1162 = vmatprep.subr.mxu0 0.0
    %1163 = vmatpush1.msra.mxu0 0.0
    %1164 = vmatprep.subr.mxu0 0.0
    %1165 = vmatpush1.msra.mxu0 0.0
    %1166 = vmatprep.subr.mxu0 0.0
    %1167 = vmatpush1.msra.mxu0 0.0
    %1168 = vmatprep.subr.mxu0 0.0
    %1169 = vmatpush1.msra.mxu0 0.0
    %1170 = vmatprep.mubr.f32.mxu0 0.0
    %1171 = vmatmul.mubr.f32.gmra.mrb[0].mxu0 %v1104
    %v1172 = vpop.f32.mrb[0].mxu0
    %v1173 = vadd.f32 %v64, %v1172
    %v1174 = vpop.f32.mrb[0].mxu0
    %1175 = vdwg.mxu0
    %v1177 = vrot.slane %v1173, 1
    %v1178 = vrot.slane %v1173, 2
    %v1181 = vadd.f32 %v149, %v1177
    %v1182 = vadd.f32 %v154, %v1178
    %v1183 = vxor.u32 %v1181, 2147483648
    %v1184 = vxor.u32 %v1182, 2147483648
    %v1185 = vmul.f32 %v1183, 1.442695
    %v1186 = vpow.pop %v1185
    %v1187 = vmul.f32 %v1184, 1.442695
    %v1188 = vpow.pop %v1187
    %v1189 = vadd.f32 %v1186, 1.0
    %v1190 = vadd.f32 %v1188, 1.0
    %v1191 = vrcp.pop %v1189
    %v1192 = vmul.f32 1.0, %v1191
    %v1193 = vrcp.pop %v1190
    %v1194 = vmul.f32 1.0, %v1193
    %1195 = vrot.lane.b32.xlu0 %v1177, 64
    %v1196 = vpop.permute.xlu0 %1195
    %1197 = vrot.lane.b32.xlu0 %v1178, 64
    %v1198 = vpop.permute.xlu0 %1197
    %v1201 = vmul.f32 %v1192, %v1196
    %v1202 = vmul.f32 %v1194, %v1198
    %1205 = vrot.lane.b32.xlu0 %v1201, 64
    %v1206 = vpop.permute.xlu0 %1205
    %1207 = vrot.lane.b32.xlu0 %v1202, 64
    %v1208 = vpop.permute.xlu0 %1207
    %v1211 = vadd.f32 %v149, %v1206
    %v1212 = vadd.f32 %v154, %v1208
    %v1213 = vtanh.pop %v1211
    %v1214 = vtanh.pop %v1212
    %v1217 = vrot.slane %v1213, 1
    %v1218 = vrot.slane %v1214, 1
    %v1221 = vsub.f32 %v1095, %v1217
    %v1222 = vsub.f32 %v1096, %v1218
    %v1225 = vrot.slane %v1221, 7
    %v1226 = vrot.slane %v1222, 7
    %1227 = vrot.lane.b32.xlu0 %v1225, 96
    %v1228 = vpop.permute.xlu0 %1227
    %1229 = vrot.lane.b32.xlu0 %v1226, 96
    %v1230 = vpop.permute.xlu0 %1229
    %v1233 = vmul.f32 %v1192, %v1228
    %v1234 = vmul.f32 %v1194, %v1230
    %1237 = vrot.lane.b32.xlu0 %v1233, 32
    %v1238 = vpop.permute.xlu0 %1237
    %1239 = vrot.lane.b32.xlu0 %v1234, 32
    %v1240 = vpop.permute.xlu0 %1239
    %v1243 = vadd.f32 %v1213, %v1238
    %v1244 = vadd.f32 %v1214, %v1240
    %v1247 = vrot.slane %v1244, 7
    %1248 = vrot.lane.b32.xlu0 %v1243, 64
    %v1249 = vpop.permute.xlu0 %1248
    %1250 = vrot.lane.b32.xlu0 %v1247, 64
    %v1251 = vpop.permute.xlu0 %1250
    %vm1254 = vcmask 261127
    %1255 = vst.msk [vmem:[#allocation8 - $0x7] sm:$0x80] %vm1254, %v1249
    %vm1256 = vcmask 253952
    %1257 = vst.msk [vmem:[#allocation8 + $0x1] sm:$0x1] %vm1256, %v1251
    // Predicated region
    $region30: #{question_embedding_forward.1} parent=1 // pred_check
      _
    $region31: #{question_embedding_forward.1} parent=1 // pred_check_branch
      %1259 = sbr.rel (0) target = $region33
    $region32: #{question_embedding_forward.1} parent=1 // pred_region
      %s1261 = ssub.s32 32, 32
      %1262 = vsyncadd [#allocation4], %s1261
      %s1264 = sshll.u32 [#allocation8], 4
      %s1265 = int_to_ptr.vmem [resolvable:$true] %s1264
      %1267 = dma.vmem_to_hbm [thread:$0]  %s1265, 32, %s4, [#allocation4]
    $region33: #{question_embedding_forward.1} parent=1 // pred_fallthru
      _
    // Predicated region
    $region34: #{question_embedding_forward.1} parent=1 // pred_check
      _
    $region35: #{question_embedding_forward.1} parent=1 // pred_check_branch
      %1269 = sbr.rel (0) target = $region37
    $region36: #{question_embedding_forward.1} parent=1 // pred_region
      %1270 = dma.done [#allocation4], 32
    $region37: #{question_embedding_forward.1} parent=1 // pred_fallthru
      _
    %1271 = vsyncpa [#allocation3], 1
    %1272 = vsyncpa [#allocation6], 1
    %1273 = vsyncpa [#allocation4], 1

</llo_original>
